<compile_context>
chip_gen: v6e
topology: v6e:2x2x1
jax: 0.10.0
libtpu: 0.0.40
codegen_flags: <defaults>
</compile_context>

<pallas_src>
import jax
import jax.numpy as jnp
import numpy as np
from jax.experimental import pallas as pl
from jax.experimental.pallas import tpu as pltpu


def whittle_kernel(states_ref, w1_ref, b1_ref, w2_ref, b2_ref, out_ref):
    # states_ref: [1, TB] int32 (lane-dense)
    # w1_ref:     [S, H] f32    (VMEM-resident across the grid)
    # b1_ref:     [1, H] f32
    # w2_ref:     [1, H] f32    (fc2 weight as a row)
    # b2_ref:     [1, 1] f32    (SMEM scalar)
    # out_ref:    [1, TB] f32   (lane-dense)
    S = w1_ref.shape[0]

    # Per-state lookup table: table[s] = relu(w1[s,:] + b1) . w2 + b2
    # All VPU elementwise + one XLU lane-reduce over H; no MXU involved.
    act = jnp.maximum(w1_ref[...] + b1_ref[...], 0.0)            # [S, H]
    table = jnp.sum(act * w2_ref[...], axis=1, keepdims=True)    # [S, 1]
    table = table + b2_ref[0, 0]                                 # [S, 1]

    # Per-batch result is just a table lookup: S lane-wide selects on the VPU.
    idx = states_ref[...] - 1                                    # [1, TB] int32
    out = jnp.zeros(idx.shape, jnp.float32)
    for s in range(S):                                           # S is small & static
        out = jnp.where(idx == s, table[s:s + 1, :], out)        # [1,1] lane-splat
    out_ref[...] = out


def new_whittle_forward(states, w1, b1, w2, b2, *, tb=2048):
    """states: [B, 1] (or [B]) int, values in 1..state_size. Returns [B] float32.

    w1: [state_size, fc1_unit], b1: [1, fc1_unit] (or [fc1_unit]),
    w2: [fc1_unit, 1] (or [1, fc1_unit]), b2: [1, 1] (or scalar).
    """
    B = states.shape[0]
    S, H = w1.shape

    states_row = states.reshape(1, B).astype(jnp.int32)      # lane-dense input
    b1_row = b1.reshape(1, H).astype(jnp.float32)
    w2_row = w2.reshape(1, H).astype(jnp.float32)            # fc2 weight as a row
    b2_sc = b2.reshape(1, 1).astype(jnp.float32)

    if B <= tb:
        TB, Bp = B, B
    else:
        TB = tb                                              # multiple of 128
        Bp = -(-B // TB) * TB
        if Bp != B:
            # pad with a valid state so padded lanes stay well-defined; sliced off below
            states_row = jnp.pad(states_row, ((0, 0), (0, Bp - B)), constant_values=1)

    out = pl.pallas_call(
        whittle_kernel,
        out_shape=jax.ShapeDtypeStruct((1, Bp), jnp.float32),
        grid_spec=pl.GridSpec(
            grid=(Bp // TB,),
            in_specs=[
                pl.BlockSpec((1, TB), lambda i: (0, i)),     # states stream
                pl.BlockSpec((S, H), lambda i: (0, 0)),      # w1 (resident)
                pl.BlockSpec((1, H), lambda i: (0, 0)),      # b1 (resident)
                pl.BlockSpec((1, H), lambda i: (0, 0)),      # w2 row (resident)
                pl.BlockSpec(memory_space=pltpu.MemorySpace.SMEM),  # b2 scalar
            ],
            out_specs=pl.BlockSpec((1, TB), lambda i: (0, i)),
        ),
        compiler_params=pltpu.CompilerParams(
            dimension_semantics=("parallel",),               # megacore-split batch (v7x)
        ),
    )(states_row, w1.astype(jnp.float32), b1_row, w2_row, b2_sc)

    return out.reshape(Bp)[:B]                               # squeeze + drop padding


def xavier_uniform(key, fan_out, fan_in):
    # torch.nn.init.xavier_uniform_ on a weight of shape [fan_out, fan_in]
    bound = float(np.sqrt(6.0 / (fan_in + fan_out)))
    return jax.random.uniform(
        key, (fan_out, fan_in), dtype=jnp.float32, minval=-bound, maxval=bound
    )


def make_params(key, state_size=4, fc1_unit=256):
    k1, k2 = jax.random.split(key)
    # Torch-layout weights, then transpose for x @ W^T convention.
    fc1_w = xavier_uniform(k1, fc1_unit, state_size)   # [256, 4]
    fc2_w = xavier_uniform(k2, 1, fc1_unit)            # [1, 256]
    w1 = fc1_w.T                                       # [4, 256]
    b1 = jnp.zeros((1, fc1_unit), jnp.float32)
    w2 = fc2_w.T                                       # [256, 1]
    b2 = jnp.zeros((1, 1), jnp.float32)
    return w1, b1, w2, b2


def reference_forward(states, w1, b1, w2, b2):
    # Pure-JAX reference replicating PyTorch semantics.
    idx = states.astype(jnp.int32).reshape(-1) - 1
    onehot = jax.nn.one_hot(idx, w1.shape[0], dtype=jnp.float32)
    hidden = jnp.maximum(onehot @ w1 + b1, 0.0)
    out = hidden @ w2 + b2
    return out[:, 0]


if __name__ == "__main__":
    key = jax.random.PRNGKey(0)
    pkey, skey1, skey2 = jax.random.split(key, 3)

    state_size = 4
    fc1_unit = 256

    w1, b1, w2, b2 = make_params(pkey, state_size, fc1_unit)

    # --- small batch (single grid step, block == full array) ---
    batch = 8
    states = jax.random.randint(
        skey1, (batch, 1), minval=1, maxval=state_size + 1, dtype=jnp.int32
    )
    out = jax.block_until_ready(new_whittle_forward(states, w1, b1, w2, b2))
    ref = reference_forward(states, w1, b1, w2, b2)
    np.testing.assert_allclose(np.asarray(out), np.asarray(ref), rtol=1e-5, atol=1e-5)
    assert out.shape == (batch,)

    # --- larger batch exercising the tiled (multi-step, padded) path ---
    batch2 = 300
    states2 = jax.random.randint(
        skey2, (batch2, 1), minval=1, maxval=state_size + 1, dtype=jnp.int32
    )
    out2 = jax.block_until_ready(new_whittle_forward(states2, w1, b1, w2, b2, tb=128))
    ref2 = reference_forward(states2, w1, b1, w2, b2)
    np.testing.assert_allclose(np.asarray(out2), np.asarray(ref2), rtol=1e-5, atol=1e-5)
    assert out2.shape == (batch2,)

    print("KERNEL_OK")
</pallas_src>

<mosaic_0001>
module attributes {stable_mosaic.version = 11 : i64} {
  func.func @whittle_kernel(%arg0: i32, %arg1: memref<1x8xi32, #tpu.memory_space<vmem>>, %arg2: memref<4x256xf32, #tpu.memory_space<vmem>>, %arg3: memref<1x256xf32, #tpu.memory_space<vmem>>, %arg4: memref<1x256xf32, #tpu.memory_space<vmem>>, %arg5: memref<1x1xf32, #tpu.memory_space<smem>>, %arg6: memref<1x8xf32, #tpu.memory_space<vmem>>) attributes {dimension_semantics = [#tpu.dimension_semantics<parallel>], iteration_bounds = array<i64: 1>, scalar_prefetch = 0 : i64, scratch_operands = 0 : i64, tpu.core_type = #tpu.core_type<tc>, window_params = [{transform_indices = @transform_0, window_bounds = array<i64: 1, 8>}, {pipeline_mode = #tpu.pipeline_mode<synchronous>, transform_indices = @transform_1, window_bounds = array<i64: 4, 256>}, {pipeline_mode = #tpu.pipeline_mode<synchronous>, transform_indices = @transform_2, window_bounds = array<i64: 1, 256>}, {pipeline_mode = #tpu.pipeline_mode<synchronous>, transform_indices = @transform_3, window_bounds = array<i64: 1, 256>}, {transform_indices = @transform_4, window_bounds = array<i64: 1, 1>}, {transform_indices = @transform_5, window_bounds = array<i64: 1, 8>}]} {
    %c0 = arith.constant 0 : index
    %c0_0 = arith.constant 0 : index
    %0 = vector.load %arg2[%c0, %c0_0] : memref<4x256xf32, #tpu.memory_space<vmem>>, vector<4x256xf32>
    %c0_1 = arith.constant 0 : index
    %c0_2 = arith.constant 0 : index
    %1 = vector.load %arg3[%c0_1, %c0_2] : memref<1x256xf32, #tpu.memory_space<vmem>>, vector<1x256xf32>
    %2 = vector.broadcast %1 : vector<1x256xf32> to vector<4x256xf32>
    %3 = arith.addf %0, %2 : vector<4x256xf32>
    %cst = arith.constant 0.000000e+00 : f32
    %4 = vector.broadcast %cst : f32 to vector<4x256xf32>
    %5 = arith.maximumf %3, %4 : vector<4x256xf32>
    %c0_3 = arith.constant 0 : index
    %c0_4 = arith.constant 0 : index
    %6 = vector.load %arg4[%c0_3, %c0_4] : memref<1x256xf32, #tpu.memory_space<vmem>>, vector<1x256xf32>
    %7 = vector.broadcast %6 : vector<1x256xf32> to vector<4x256xf32>
    %8 = arith.mulf %5, %7 : vector<4x256xf32>
    %cst_5 = arith.constant dense<0.000000e+00> : vector<4xf32>
    %9 = vector.multi_reduction <add>, %8, %cst_5 [1] : vector<4x256xf32> to vector<4xf32>
    %10 = vector.shape_cast %9 : vector<4xf32> to vector<4x1xf32>
    %c0_6 = arith.constant 0 : index
    %c0_7 = arith.constant 0 : index
    %11 = memref.load %arg5[%c0_6, %c0_7] : memref<1x1xf32, #tpu.memory_space<smem>>
    %12 = vector.broadcast %11 : f32 to vector<4x1xf32>
    %13 = arith.addf %10, %12 : vector<4x1xf32>
    %c0_8 = arith.constant 0 : index
    %c0_9 = arith.constant 0 : index
    %14 = vector.load %arg1[%c0_8, %c0_9] : memref<1x8xi32, #tpu.memory_space<vmem>>, vector<1x8xi32>
    %c1_i32 = arith.constant 1 : i32
    %15 = vector.broadcast %c1_i32 : i32 to vector<1x8xi32>
    %16 = arith.subi %14, %15 : vector<1x8xi32>
    %cst_10 = arith.constant 0.000000e+00 : f32
    %17 = vector.broadcast %cst_10 : f32 to vector<1x8xf32>
    %c0_i32 = arith.constant 0 : i32
    %18 = vector.broadcast %c0_i32 : i32 to vector<1x8xi32>
    %19 = arith.cmpi eq, %16, %18 : vector<1x8xi32>
    %20 = vector.extract_strided_slice %13 {offsets = [0, 0], sizes = [1, 1], strides = [1, 1]} : vector<4x1xf32> to vector<1x1xf32>
    %21 = vector.shape_cast %20 : vector<1x1xf32> to vector<1x1xf32>
    %22 = vector.broadcast %21 : vector<1x1xf32> to vector<1x8xf32>
    %23 = arith.select %19, %22, %17 : vector<1x8xi1>, vector<1x8xf32>
    %c1_i32_11 = arith.constant 1 : i32
    %24 = vector.broadcast %c1_i32_11 : i32 to vector<1x8xi32>
    %25 = arith.cmpi eq, %16, %24 : vector<1x8xi32>
    %26 = vector.extract_strided_slice %13 {offsets = [1, 0], sizes = [1, 1], strides = [1, 1]} : vector<4x1xf32> to vector<1x1xf32>
    %27 = vector.shape_cast %26 : vector<1x1xf32> to vector<1x1xf32>
    %28 = vector.broadcast %27 : vector<1x1xf32> to vector<1x8xf32>
    %29 = arith.select %25, %28, %23 : vector<1x8xi1>, vector<1x8xf32>
    %c2_i32 = arith.constant 2 : i32
    %30 = vector.broadcast %c2_i32 : i32 to vector<1x8xi32>
    %31 = arith.cmpi eq, %16, %30 : vector<1x8xi32>
    %32 = vector.extract_strided_slice %13 {offsets = [2, 0], sizes = [1, 1], strides = [1, 1]} : vector<4x1xf32> to vector<1x1xf32>
    %33 = vector.shape_cast %32 : vector<1x1xf32> to vector<1x1xf32>
    %34 = vector.broadcast %33 : vector<1x1xf32> to vector<1x8xf32>
    %35 = arith.select %31, %34, %29 : vector<1x8xi1>, vector<1x8xf32>
    %c3_i32 = arith.constant 3 : i32
    %36 = vector.broadcast %c3_i32 : i32 to vector<1x8xi32>
    %37 = arith.cmpi eq, %16, %36 : vector<1x8xi32>
    %38 = vector.extract_strided_slice %13 {offsets = [3, 0], sizes = [1, 1], strides = [1, 1]} : vector<4x1xf32> to vector<1x1xf32>
    %39 = vector.shape_cast %38 : vector<1x1xf32> to vector<1x1xf32>
    %40 = vector.broadcast %39 : vector<1x1xf32> to vector<1x8xf32>
    %41 = arith.select %37, %40, %35 : vector<1x8xi1>, vector<1x8xf32>
    %c0_12 = arith.constant 0 : index
    %c0_13 = arith.constant 0 : index
    %42 = vector.load %arg6[%c0_12, %c0_13] : memref<1x8xf32, #tpu.memory_space<vmem>>, vector<1x8xf32>
    tpu.vector_store %arg6[%c0_12, %c0_13], %41 {strides = array<i32>} : memref<1x8xf32, #tpu.memory_space<vmem>>, vector<1x8xf32>,
    return
  }
  func.func @transform_0(%arg0: i32) -> (i32, i32) {
    %c0_i32 = arith.constant 0 : i32
    %c0_i32_0 = arith.constant 0 : i32
    return %c0_i32, %arg0 : i32, i32
  }
  func.func @transform_1(%arg0: i32) -> (i32, i32) {
    %c0_i32 = arith.constant 0 : i32
    %c0_i32_0 = arith.constant 0 : i32
    %c0_i32_1 = arith.constant 0 : i32
    return %c0_i32, %c0_i32_0 : i32, i32
  }
  func.func @transform_2(%arg0: i32) -> (i32, i32) {
    %c0_i32 = arith.constant 0 : i32
    %c0_i32_0 = arith.constant 0 : i32
    %c0_i32_1 = arith.constant 0 : i32
    return %c0_i32, %c0_i32_0 : i32, i32
  }
  func.func @transform_3(%arg0: i32) -> (i32, i32) {
    %c0_i32 = arith.constant 0 : i32
    %c0_i32_0 = arith.constant 0 : i32
    %c0_i32_1 = arith.constant 0 : i32
    return %c0_i32, %c0_i32_0 : i32, i32
  }
  func.func @transform_4(%arg0: i32) -> (i32, i32) {
    %c0_i32 = arith.constant 0 : i32
    %c0_i32_0 = arith.constant 0 : i32
    %c0_i32_1 = arith.constant 0 : i32
    return %c0_i32, %c0_i32_0 : i32, i32
  }
  func.func @transform_5(%arg0: i32) -> (i32, i32) {
    %c0_i32 = arith.constant 0 : i32
    %c0_i32_0 = arith.constant 0 : i32
    return %c0_i32, %arg0 : i32, i32
  }
}

</mosaic_0001>

<llo_original>
// kernel: tpu_custom_call.1
$region0: #{tpu_custom_call.1}
  #allocation0 [shape = 'u32[]', space=smem, size = 0x4, offset = 0x4, fixed_abs, tag = 'smem constant byte address 0x4 - core index']
  #allocation1 [shape = 'u32[144,128]{1,0:T(1,128)}', space=vmem, size = 0x12000, scoped, tag = 'internal scratch']
  #allocation2 [shape = 'f32[1,1]{1,0:T(1,128)S(6)}', space=smem, size = 0x200, scoped, tag = 'scoped memory for tpu_custom_call.1']
  %s0 = inlined_call_operand.vmem [shape: s32[1,8], index: 0, kind: input, shape index: {}]
  %s1 = inlined_call_operand.hbm [shape: f32[4,256], index: 1, kind: input, shape index: {}]
  %s2 = inlined_call_operand.vmem [shape: f32[1,256], index: 2, kind: input, shape index: {}]
  %s3 = inlined_call_operand.vmem [shape: f32[1,256], index: 3, kind: input, shape index: {}]
  %s4 = inlined_call_operand.<no memory space> [shape: f32[1,1], index: 4, kind: input, shape index: {}]
  %s5 = inlined_call_operand.hbm [shape: f32[1,8], index: 5, kind: output, shape index: {}]
  %s6 = sld [smem:[#allocation0]]
  $region34: #{tpu_custom_call.1} parent=0
    _
  %s8 = ssub.s32 1, %s6
  %s9 = scalar_select 0, %s8, %s6
  %10 = sst [smem:[#allocation2]] %s4
  $region1: #{tpu_custom_call.1} parent=0
    #allocation3 [shape = 'u8[4096]{0}', space=vmem, size = 0x1000, scoped, tag = 'input window, operand 1, single buffered']
    #allocation4 [shape = 's32[1]{0}', space=sflag, size = 0x4, scoped, tag = 'scoped memory for tpu_custom_call.1']
    #allocation5 [shape = 's32[1]{0}', space=sflag, size = 0x4, scoped, tag = 'scoped memory for tpu_custom_call.1']
    #allocation6 [shape = 'u8[512]{0}', space=vmem, size = 0x400, scoped, tag = 'output window, operand 0, single buffered']
    %11 = vsyncpa [#allocation4], 0
    %12 = vsyncpa [#allocation5], 0
    // Predicated region
    $region2: #{tpu_custom_call.1} parent=1 // pred_check
      _
    $region3: #{tpu_custom_call.1} parent=1 // pred_check_branch
      %14 = sbr.rel (0) target = $region5
    $region4: #{tpu_custom_call.1} parent=1 // pred_region
      _
    $region5: #{tpu_custom_call.1} parent=1 // pred_fallthru
      _
    // Predicated region
    $region6: #{tpu_custom_call.1} parent=1 // pred_check
      _
    $region7: #{tpu_custom_call.1} parent=1 // pred_check_branch
      %16 = sbr.rel (0) target = $region9
    $region8: #{tpu_custom_call.1} parent=1 // pred_region
      %s18 = ssub.s32 128, 128
      %19 = vsyncadd [#allocation4], %s18
      %s21 = sshll.u32 [#allocation3], 4
      %s22 = int_to_ptr.vmem [resolvable:$true] %s21
      %24 = dma.hbm_to_vmem [thread:$0]  %s1, 128, %s22, [#allocation4]
    $region9: #{tpu_custom_call.1} parent=1 // pred_fallthru
      _
    // Predicated region
    $region10: #{tpu_custom_call.1} parent=1 // pred_check
      _
    $region11: #{tpu_custom_call.1} parent=1 // pred_check_branch
      %26 = sbr.rel (0) target = $region13
    $region12: #{tpu_custom_call.1} parent=1 // pred_region
      _
    $region13: #{tpu_custom_call.1} parent=1 // pred_fallthru
      _
    // Predicated region
    $region14: #{tpu_custom_call.1} parent=1 // pred_check
      _
    $region15: #{tpu_custom_call.1} parent=1 // pred_check_branch
      %28 = sbr.rel (0) target = $region17
    $region16: #{tpu_custom_call.1} parent=1 // pred_region
      _
    $region17: #{tpu_custom_call.1} parent=1 // pred_fallthru
      _
    // Predicated region
    $region18: #{tpu_custom_call.1} parent=1 // pred_check
      _
    $region19: #{tpu_custom_call.1} parent=1 // pred_check_branch
      %30 = sbr.rel (0) target = $region21
    $region20: #{tpu_custom_call.1} parent=1 // pred_region
      _
    $region21: #{tpu_custom_call.1} parent=1 // pred_fallthru
      _
    // Predicated region
    $region22: #{tpu_custom_call.1} parent=1 // pred_check
      _
    $region23: #{tpu_custom_call.1} parent=1 // pred_check_branch
      %32 = sbr.rel (0) target = $region25
    $region24: #{tpu_custom_call.1} parent=1 // pred_region
      %33 = dma.done [#allocation4], 128
    $region25: #{tpu_custom_call.1} parent=1 // pred_fallthru
      _
    %v34 = vld [vmem:[#allocation3] sm:$0xff]
    %v35 = vld [vmem:[%s2] sm:$0x3]
    %v37 = vlaneseq
    %v38 = vshrl.u32 %v37, 7
    %v39 = vsub.s32 0, %v38
    %v40 = vrot.slane %v35, %v39
    %v41 = vlaneseq
    %v42 = vshrl.u32 %v41, 7
    %v43 = vsub.s32 1, %v42
    %v44 = vrot.slane %v35, %v43
    %v45 = vcombine.low %v40, %v44
    %v47 = vadd.f32 %v34, %v45
    %v48 = vmax.f32 %v47, 0.0
    %v49 = vld [vmem:[%s3] sm:$0x3]
    %v51 = vlaneseq
    %v52 = vshrl.u32 %v51, 7
    %v53 = vsub.s32 0, %v52
    %v54 = vrot.slane %v49, %v53
    %v55 = vlaneseq
    %v56 = vshrl.u32 %v55, 7
    %v57 = vsub.s32 1, %v56
    %v58 = vrot.slane %v49, %v57
    %v59 = vcombine.low %v54, %v58
    %v61 = vmul.f32 %v48, %v59
    %v63 = vcombine.high %v61, %v61
    %vm65 = vcmask 1043456
    %v66 = vsel %vm65, %v61, 0.0
    %v67 = vsel %vm65, %v63, 0.0
    %v68 = vadd.f32 %v66, %v67
    %69 = vadd.xlane.f32.xlu0 %v68
    %v70 = vpop.xlane.xlu0 %69
    %s71 = sld [smem:[#allocation2]]
    %v72 = vstv %s71
    %v73 = vadd.f32 %v70, %v72
    %v74 = vld [vmem:[%s0] sm:$0x1]
    %v75 = vsub.s32 %v74, 1
    %vm76 = vcmp.eq.s32.totalorder %v75, 0
    %v77 = vsel %vm76, %v73, 0.0
    %vm78 = vcmp.eq.s32.totalorder %v75, 1
    %v80 = vlaneseq
    %v81 = vshrl.u32 %v80, 7
    %v82 = vsub.s32 1, %v81
    %v83 = vrot.slane %v73, %v82
    %v85 = vsel %vm78, %v83, %v77
    %vm86 = vcmp.eq.s32.totalorder %v75, 2
    %v87 = vlaneseq
    %v88 = vshrl.u32 %v87, 7
    %v89 = vsub.s32 2, %v88
    %v90 = vrot.slane %v73, %v89
    %v92 = vsel %vm86, %v90, %v85
    %vm93 = vcmp.eq.s32.totalorder %v75, 3
    %v94 = vlaneseq
    %v95 = vshrl.u32 %v94, 7
    %v96 = vsub.s32 3, %v95
    %v97 = vrot.slane %v73, %v96
    %v99 = vsel %vm93, %v97, %v92
    %vm100 = vcmask 57344
    %101 = vst.msk [vmem:[#allocation6] sm:$0x1] %vm100, %v99
    // Predicated region
    $region26: #{tpu_custom_call.1} parent=1 // pred_check
      _
    $region27: #{tpu_custom_call.1} parent=1 // pred_check_branch
      %103 = sbr.rel (0) target = $region29
    $region28: #{tpu_custom_call.1} parent=1 // pred_region
      %s105 = ssub.s32 16, 16
      %106 = vsyncadd [#allocation5], %s105
      %s108 = sshll.u32 [#allocation6], 4
      %s109 = int_to_ptr.vmem [resolvable:$true] %s108
      %111 = dma.vmem_to_hbm [thread:$0]  %s109, 16, %s5, [#allocation5]
    $region29: #{tpu_custom_call.1} parent=1 // pred_fallthru
      _
    // Predicated region
    $region30: #{tpu_custom_call.1} parent=1 // pred_check
      _
    $region31: #{tpu_custom_call.1} parent=1 // pred_check_branch
      %113 = sbr.rel (0) target = $region33
    $region32: #{tpu_custom_call.1} parent=1 // pred_region
      %114 = dma.done [#allocation5], 16
    $region33: #{tpu_custom_call.1} parent=1 // pred_fallthru
      _
    %115 = vsyncpa [#allocation4], 1
    %116 = vsyncpa [#allocation5], 1

</llo_original>
